<compile_context>
chip_gen: v5e
topology: v5e:2x2
jax: 0.10.0
libtpu: 0.0.40
codegen_flags: <defaults>
</compile_context>

<pallas_src>
import functools

import numpy as np
import jax
import jax.numpy as jnp
from jax.experimental import pallas as pl
from jax.experimental.pallas import tpu as pltpu


def make_sinusoidal_pe(max_len: int, d_model: int, dtype=jnp.float32):
    """Deterministic PE table, identical math to the PyTorch __init__."""
    position = np.arange(max_len, dtype=np.float64)[:, None]
    div_term = np.exp(
        np.arange(0, d_model, 2, dtype=np.float64) * (-np.log(10000.0) / d_model)
    )
    pe = np.zeros((max_len, d_model), dtype=np.float64)
    pe[:, 0::2] = np.sin(position * div_term)
    pe[:, 1::2] = np.cos(position * div_term)
    return jnp.asarray(pe, dtype=dtype)


def _pe_add_kernel(x_ref, pe_ref, o_ref):
    # Pure streaming add on a lane-dense (tile_s, B*D) block.
    o_ref[...] = (x_ref[...] + pe_ref[...]).astype(o_ref.dtype)


def _pe_add_dropout_kernel(x_ref, pe_ref, u_ref, o_ref, *, dropout_p, inv_keep):
    # Inverted dropout: keep with prob (1-p), scale kept values by 1/(1-p).
    y = x_ref[...] + pe_ref[...]
    keep = u_ref[...] >= jnp.float32(dropout_p)
    o_ref[...] = jnp.where(keep, y * inv_keep, 0.0).astype(o_ref.dtype)


def _pick_tile_s(S, row_bytes, target_bytes=2 * 1024 * 1024):
    """Largest S-tile whose block is ~target_bytes; keep sublane-aligned."""
    tile_s = max(1, target_bytes // max(1, row_bytes))
    if tile_s >= S:
        return S
    tile_s = max(8, (tile_s // 8) * 8)   # (8,128) sublane rule unless full-extent
    return S if tile_s >= S else int(tile_s)


def positional_encoding(
    x,
    pe,
    *,
    dropout_p=0.1,
    train=False,
    rng_key=None,
    tile_s=None,
    donate_x=False,
):
    """Forward pass of PositionalEncoding: out = dropout(x + pe[:S])."""
    S, B, D = x.shape
    assert pe.shape[1] == D and pe.shape[0] >= S
    dropout_p = float(dropout_p)
    use_dropout = bool(train) and dropout_p > 0.0

    if use_dropout and dropout_p >= 1.0:
        # nn.Dropout(p=1.0): everything is dropped.
        return jnp.zeros_like(x)

    BD = B * D
    # Lane-dense layout plumbing (wrapper-side, free reshapes):
    #   x:  (S, B, D) -> (S, B*D)
    #   pe: (S, D)    -> (S, B*D) by tiling over the batch axis (matches the
    #                    reshape ordering [b0's D, b1's D, ...]).
    x2 = x.reshape(S, BD)
    pe2 = jnp.tile(pe[:S], (1, B)).astype(x.dtype)

    itemsize = jnp.dtype(x.dtype).itemsize
    if tile_s is None:
        tile_s = _pick_tile_s(S, BD * itemsize)
    tile_s = int(min(tile_s, S))
    if tile_s < S:
        tile_s = max(8, (tile_s // 8) * 8)
        tile_s = min(tile_s, S)
    grid = (pl.cdiv(S, tile_s),)

    block = (tile_s, BD)
    tile_spec = pl.BlockSpec(block, lambda i: (i, 0))
    out_spec = pl.BlockSpec(block, lambda i: (i, 0))

    if use_dropout:
        if rng_key is None:
            rng_key = jax.random.PRNGKey(0)
        u = jax.random.uniform(rng_key, (S, BD), dtype=jnp.float32)
        kernel = functools.partial(
            _pe_add_dropout_kernel,
            dropout_p=dropout_p,
            inv_keep=1.0 / (1.0 - dropout_p),
        )
        inputs = (x2, pe2, u)
        in_specs = [tile_spec, tile_spec, tile_spec]
    else:
        kernel = _pe_add_kernel
        inputs = (x2, pe2)
        in_specs = [tile_spec, tile_spec]

    y2 = pl.pallas_call(
        kernel,
        out_shape=jax.ShapeDtypeStruct((S, BD), x.dtype),
        grid=grid,
        in_specs=in_specs,
        out_specs=out_spec,
        # Independent S-tiles -> "parallel" lets v7x shard the grid across its
        # two TensorCores; neutral on v5e/v6e.  Raise the scoped VMEM limit so
        # the ~2 MiB double-buffered blocks compile on every generation while
        # staying well under v7x's 64 MiB physical VMEM.
        compiler_params=pltpu.CompilerParams(
            dimension_semantics=("parallel",),
            vmem_limit_bytes=48 * 1024 * 1024,
        ),
        input_output_aliases=({0: 0} if donate_x else {}),
    )(*inputs)

    return y2.reshape(S, B, D)


if __name__ == "__main__":
    S, B, D = 8, 2, 32          # seq_len, batch, d_model
    MAX_LEN = 64
    P_DROP = 0.1

    key = jax.random.PRNGKey(0)
    kx, kd = jax.random.split(key)
    x = jax.random.normal(kx, (S, B, D), dtype=jnp.float32)
    pe = make_sinusoidal_pe(MAX_LEN, D)

    ref = x + pe[:S][:, None, :]

    # Eval mode: dropout is identity -> must match pure-JAX reference exactly.
    y_eval = positional_encoding(x, pe, dropout_p=P_DROP, train=False)
    jax.block_until_ready(y_eval)
    assert y_eval.shape == (S, B, D)
    assert jnp.allclose(y_eval, ref, atol=1e-6), "eval-mode mismatch vs reference"

    # Training mode: stochastic inverted dropout.  Every output element must be
    # either 0 (dropped) or the reference value scaled by 1/(1-p) (kept).
    y_train = positional_encoding(
        x, pe, dropout_p=P_DROP, train=True, rng_key=kd
    )
    jax.block_until_ready(y_train)
    assert y_train.shape == (S, B, D)
    scaled_ref = ref * (1.0 / (1.0 - P_DROP))
    ok = jnp.where(
        y_train == 0.0, True, jnp.isclose(y_train, scaled_ref, atol=1e-5)
    )
    assert bool(jnp.all(ok)), "train-mode values are neither 0 nor scaled(x+pe)"

    print("KERNEL_OK")
</pallas_src>

<mosaic_0001>
module attributes {stable_mosaic.version = 11 : i64} {
  func.func @_pe_add_kernel(%arg0: i32, %arg1: memref<8x64xf32, #tpu.memory_space<vmem>>, %arg2: memref<8x64xf32, #tpu.memory_space<vmem>>, %arg3: memref<8x64xf32, #tpu.memory_space<vmem>>) attributes {dimension_semantics = [#tpu.dimension_semantics<parallel>], iteration_bounds = array<i64: 1>, scalar_prefetch = 0 : i64, scratch_operands = 0 : i64, tpu.core_type = #tpu.core_type<tc>, window_params = [{transform_indices = @transform_0, window_bounds = array<i64: 8, 64>}, {transform_indices = @transform_1, window_bounds = array<i64: 8, 64>}, {transform_indices = @transform_2, window_bounds = array<i64: 8, 64>}]} {
    %c0 = arith.constant 0 : index
    %c0_0 = arith.constant 0 : index
    %0 = vector.load %arg1[%c0, %c0_0] : memref<8x64xf32, #tpu.memory_space<vmem>>, vector<8x64xf32>
    %c0_1 = arith.constant 0 : index
    %c0_2 = arith.constant 0 : index
    %1 = vector.load %arg2[%c0_1, %c0_2] : memref<8x64xf32, #tpu.memory_space<vmem>>, vector<8x64xf32>
    %2 = arith.addf %0, %1 : vector<8x64xf32>
    %c0_3 = arith.constant 0 : index
    %c0_4 = arith.constant 0 : index
    %3 = vector.load %arg3[%c0_3, %c0_4] : memref<8x64xf32, #tpu.memory_space<vmem>>, vector<8x64xf32>
    tpu.vector_store %arg3[%c0_3, %c0_4], %2 {strides = array<i32>} : memref<8x64xf32, #tpu.memory_space<vmem>>, vector<8x64xf32>,
    return
  }
  func.func @transform_0(%arg0: i32) -> (i32, i32) {
    %c0_i32 = arith.constant 0 : i32
    %c0_i32_0 = arith.constant 0 : i32
    return %arg0, %c0_i32 : i32, i32
  }
  func.func @transform_1(%arg0: i32) -> (i32, i32) {
    %c0_i32 = arith.constant 0 : i32
    %c0_i32_0 = arith.constant 0 : i32
    return %arg0, %c0_i32 : i32, i32
  }
  func.func @transform_2(%arg0: i32) -> (i32, i32) {
    %c0_i32 = arith.constant 0 : i32
    %c0_i32_0 = arith.constant 0 : i32
    return %arg0, %c0_i32 : i32, i32
  }
}

</mosaic_0001>

<llo_original>
// kernel: tpu_custom_call.1
$region0: #{tpu_custom_call.1}
  #allocation0 [shape = 'u32[]', space=smem, size = 0x4, offset = 0x4, fixed_abs, tag = 'smem constant byte address 0x4 - core index']
  #allocation1 [shape = 'u32[72,128]{1,0:T(1,128)}', space=vmem, size = 0x9000, scoped, tag = 'internal scratch']
  %s0 = inlined_call_operand.hbm [shape: f32[8,64], index: 0, kind: input, shape index: {}]
  %s1 = inlined_call_operand.hbm [shape: f32[8,64], index: 1, kind: input, shape index: {}]
  %s2 = inlined_call_operand.hbm [shape: f32[8,64], index: 2, kind: output, shape index: {}]
  %s3 = sld [smem:[#allocation0]]
  $region26: #{tpu_custom_call.1} parent=0
    _
  %s5 = ssub.s32 1, %s3
  %s6 = scalar_select 0, %s5, %s3
  $region1: #{tpu_custom_call.1} parent=0
    #allocation2 [shape = 'u8[4096]{0}', space=vmem, size = 0x1000, scoped, tag = 'input window, operand 0, single buffered']
    #allocation3 [shape = 's32[1]{0}', space=sflag, size = 0x4, scoped, tag = 'scoped memory for tpu_custom_call.1']
    #allocation4 [shape = 's32[1]{0}', space=sflag, size = 0x4, scoped, tag = 'scoped memory for tpu_custom_call.1']
    #allocation5 [shape = 'u8[4096]{0}', space=vmem, size = 0x1000, scoped, tag = 'input window, operand 1, single buffered']
    #allocation6 [shape = 's32[1]{0}', space=sflag, size = 0x4, scoped, tag = 'scoped memory for tpu_custom_call.1']
    #allocation7 [shape = 'u8[4096]{0}', space=vmem, size = 0x1000, scoped, tag = 'output window, operand 0, single buffered']
    %7 = vsyncpa [#allocation3], 0
    %8 = vsyncpa [#allocation6], 0
    %9 = vsyncpa [#allocation4], 0
    // Predicated region
    $region2: #{tpu_custom_call.1} parent=1 // pred_check
      _
    $region3: #{tpu_custom_call.1} parent=1 // pred_check_branch
      %11 = sbr.rel (0) target = $region5
    $region4: #{tpu_custom_call.1} parent=1 // pred_region
      %13 = vsyncadd [#allocation3], 0
      %s15 = sshll.u32 %s0, 4
      %s16 = int_to_ptr.hbm [resolvable:$true] %s15
      %s17 = sshll.u32 [#allocation2], 4
      %s18 = int_to_ptr.vmem [resolvable:$true] %s17
      %20 = dma.hbm_to_vmem [thread:$0]  %s16, 128, %s18, [#allocation3]
    $region5: #{tpu_custom_call.1} parent=1 // pred_fallthru
      _
    // Predicated region
    $region6: #{tpu_custom_call.1} parent=1 // pred_check
      _
    $region7: #{tpu_custom_call.1} parent=1 // pred_check_branch
      %22 = sbr.rel (0) target = $region9
    $region8: #{tpu_custom_call.1} parent=1 // pred_region
      %24 = vsyncadd [#allocation6], 0
      %s26 = sshll.u32 %s1, 4
      %s27 = int_to_ptr.hbm [resolvable:$true] %s26
      %s28 = sshll.u32 [#allocation5], 4
      %s29 = int_to_ptr.vmem [resolvable:$true] %s28
      %31 = dma.hbm_to_vmem [thread:$0]  %s27, 128, %s29, [#allocation6]
    $region9: #{tpu_custom_call.1} parent=1 // pred_fallthru
      _
    // Predicated region
    $region10: #{tpu_custom_call.1} parent=1 // pred_check
      _
    $region11: #{tpu_custom_call.1} parent=1 // pred_check_branch
      %33 = sbr.rel (0) target = $region13
    $region12: #{tpu_custom_call.1} parent=1 // pred_region
      %35 = dma.done [#allocation3], 128
    $region13: #{tpu_custom_call.1} parent=1 // pred_fallthru
      _
    // Predicated region
    $region14: #{tpu_custom_call.1} parent=1 // pred_check
      _
    $region15: #{tpu_custom_call.1} parent=1 // pred_check_branch
      %37 = sbr.rel (0) target = $region17
    $region16: #{tpu_custom_call.1} parent=1 // pred_region
      %39 = dma.done [#allocation6], 128
    $region17: #{tpu_custom_call.1} parent=1 // pred_fallthru
      _
    %v40 = vld [vmem:[#allocation2] sm:$0xff]
    %v41 = vld [vmem:[#allocation5] sm:$0xff]
    %v42 = vadd.f32 %v40, %v41
    %vm43 = vcmask 523264
    %44 = vst.msk [vmem:[#allocation7] sm:$0xff] %vm43, %v42
    // Predicated region
    $region18: #{tpu_custom_call.1} parent=1 // pred_check
      _
    $region19: #{tpu_custom_call.1} parent=1 // pred_check_branch
      %46 = sbr.rel (0) target = $region21
    $region20: #{tpu_custom_call.1} parent=1 // pred_region
      %48 = vsyncadd [#allocation4], 0
      %s50 = sshll.u32 [#allocation7], 4
      %s51 = int_to_ptr.vmem [resolvable:$true] %s50
      %s52 = sshll.u32 %s2, 4
      %s53 = int_to_ptr.hbm [resolvable:$true] %s52
      %55 = dma.vmem_to_hbm [thread:$0]  %s51, 128, %s53, [#allocation4]
    $region21: #{tpu_custom_call.1} parent=1 // pred_fallthru
      _
    // Predicated region
    $region22: #{tpu_custom_call.1} parent=1 // pred_check
      _
    $region23: #{tpu_custom_call.1} parent=1 // pred_check_branch
      %57 = sbr.rel (0) target = $region25
    $region24: #{tpu_custom_call.1} parent=1 // pred_region
      %59 = dma.done [#allocation4], 128
    $region25: #{tpu_custom_call.1} parent=1 // pred_fallthru
      _
    %60 = vsyncpa [#allocation3], 1
    %61 = vsyncpa [#allocation6], 1
    %62 = vsyncpa [#allocation4], 1

</llo_original>
